<compile_context>
chip_gen: v6e
topology: v6e:2x2x1
jax: 0.10.0
libtpu: 0.0.40
codegen_flags: <defaults>
</compile_context>

<pallas_src>
import functools
import math

import jax
import jax.numpy as jnp
from jax.experimental import pallas as pl
from jax.experimental.pallas import tpu as pltpu


# Large finite negative instead of -inf: avoids NaN for fully-masked rows while
# still underflowing to exactly 0 after exp() for partially-masked rows.
DEFAULT_MASK_VALUE = -0.7 * float(jnp.finfo(jnp.float32).max)


def _pick_block(dim, target, align):
    """Largest block <= target that is `align`-aligned and evenly divides `dim`.

    Falls back to the full dimension (always legal) when no such block exists.
    """
    if dim <= target:
        return dim
    t = (target // align) * align
    while t >= align:
        if dim % t == 0:
            return t
        t -= align
    return dim


# ----------------------------------------------------------------------------
# Kernel 1: tiled linear  y = x @ W_t + b   (W_t pre-transposed to (in, out))
# ----------------------------------------------------------------------------
def _linear_kernel(x_ref, w_ref, b_ref, o_ref, acc_ref, *, compute_dtype):
    k_idx = pl.program_id(2)

    @pl.when(k_idx == 0)
    def _init():
        acc_ref[...] = jnp.zeros_like(acc_ref)

    x = x_ref[...].astype(compute_dtype)          # (tm, tk)
    w = w_ref[...].astype(compute_dtype)          # (tk, tn)  -- already (in, out)
    acc_ref[...] += jnp.dot(x, w, preferred_element_type=jnp.float32)

    @pl.when(k_idx == pl.num_programs(2) - 1)
    def _finalize():
        o_ref[...] = (acc_ref[...] + b_ref[...].astype(jnp.float32)).astype(o_ref.dtype)


def linear(x2d, w_t, b, *, out_dtype, compute_dtype,
           block_m=256, block_n=256, block_k=512):
    """x2d: (M, K); w_t: (K, N) (already transposed); b: (N,)  ->  (M, N) out_dtype."""
    M, K = x2d.shape
    K2, N = w_t.shape
    assert K == K2, (x2d.shape, w_t.shape)

    tm = _pick_block(M, block_m, 8)
    tn = _pick_block(N, block_n, 128)
    tk = _pick_block(K, block_k, 128)
    grid = (M // tm, N // tn, K // tk)

    return pl.pallas_call(
        functools.partial(_linear_kernel, compute_dtype=compute_dtype),
        out_shape=jax.ShapeDtypeStruct((M, N), out_dtype),
        grid_spec=pltpu.PrefetchScalarGridSpec(
            num_scalar_prefetch=0,
            grid=grid,
            in_specs=[
                pl.BlockSpec((tm, tk), lambda i, j, k: (i, k)),   # x
                pl.BlockSpec((tk, tn), lambda i, j, k: (k, j)),   # w_t (in, out)
                pl.BlockSpec((1, tn), lambda i, j, k: (0, j)),    # bias
            ],
            out_specs=pl.BlockSpec((tm, tn), lambda i, j, k: (i, j)),
            scratch_shapes=[pltpu.VMEM((tm, tn), jnp.float32)],
        ),
        compiler_params=pltpu.CompilerParams(
            dimension_semantics=("parallel", "parallel", "arbitrary")),
    )(x2d, w_t, b.reshape(1, N).astype(jnp.float32))


# ----------------------------------------------------------------------------
# Kernel 2: flash-style multi-head attention, all heads per block
# ----------------------------------------------------------------------------
def _flash_mha_kernel(*refs, num_heads, head_dim, compute_dtype, has_mask):
    if has_mask:
        q_ref, k_ref, v_ref, mask_ref, o_ref, m_scr, l_scr, acc_scr = refs
    else:
        q_ref, k_ref, v_ref, o_ref, m_scr, l_scr, acc_scr = refs

    kv_idx = pl.program_id(2)

    @pl.when(kv_idx == 0)
    def _init():
        m_scr[...] = jnp.full_like(m_scr, -jnp.inf)
        l_scr[...] = jnp.zeros_like(l_scr)
        acc_scr[...] = jnp.zeros_like(acc_scr)

    if has_mask:
        # Hoisted out of the head loop: ONE (tq, tk) select -> additive bias,
        # then H cheap adds instead of H full vselects.
        bias = jnp.where(mask_ref[0] != 0, 0.0, DEFAULT_MASK_VALUE).astype(jnp.float32)

    # 1/sqrt(head_dim) is already folded into the Q projection weights.
    q_all = q_ref[0].astype(compute_dtype)        # (tq, D)
    k_all = k_ref[0].astype(compute_dtype)        # (tk, D)
    v_all = v_ref[0].astype(compute_dtype)        # (tk, D)

    for h in range(num_heads):                    # heads live in the lane dimension
        lo = h * head_dim
        q_h = q_all[:, lo:lo + head_dim]          # (tq, Dh)
        k_h = k_all[:, lo:lo + head_dim]          # (tk, Dh)
        v_h = v_all[:, lo:lo + head_dim]          # (tk, Dh)

        s = jax.lax.dot_general(                  # (tq, tk) f32, contract over Dh
            q_h, k_h, (((1,), (1,)), ((), ())),
            preferred_element_type=jnp.float32)
        if has_mask:
            s = s + bias

        m_prev = m_scr[h]                                         # (tq, 1)
        m_new = jnp.maximum(m_prev, jnp.max(s, axis=-1, keepdims=True))
        alpha = jnp.exp(m_prev - m_new)
        p = jnp.exp(s - m_new)                                    # (tq, tk) f32

        l_scr[h] = alpha * l_scr[h] + jnp.sum(p, axis=-1, keepdims=True)
        acc_scr[h] = alpha * acc_scr[h] + jnp.dot(
            p.astype(compute_dtype), v_h, preferred_element_type=jnp.float32)
        m_scr[h] = m_new

    @pl.when(kv_idx == pl.num_programs(2) - 1)
    def _finalize():
        outs = []
        for h in range(num_heads):
            inv_l = pl.reciprocal(l_scr[h], approx=False)         # exact, once per block
            outs.append(acc_scr[h] * inv_l)                       # (tq, Dh) f32
        # Lane-dense (tq, D) output tile written directly in (B, S, D) layout.
        o_ref[0] = jnp.concatenate(outs, axis=-1).astype(o_ref.dtype)


def flash_mha(q_arr, k_arr, v_arr, mask_i8, *, num_heads, fused_qkv,
              out_dtype, compute_dtype, block_q=128, block_k=256):
    """Attention over (B, S, D)-layout activations; output is (B, Sq, D) out_dtype.

    If fused_qkv: q_arr is k_arr is v_arr is the fused (B, S, 3D) QKV projection and
    the q/k/v tiles are taken as lane-offset D-wide blocks (no HBM slicing).
    mask_i8 is None (no-mask variant), (1, Sq, Skv) (shared / 2D mask, kept resident
    through its index_map), or (B, Sq, Skv) int8 with nonzero = keep.
    """
    B, Sq, last = q_arr.shape
    D = last // 3 if fused_qkv else last
    Skv = k_arr.shape[1]
    Dh = D // num_heads
    has_mask = mask_i8 is not None

    tq = _pick_block(Sq, block_q, 32)    # 32-aligned: int8 mask tile + bf16 out tile
    tk = _pick_block(Skv, block_k, 128)
    grid = (B, Sq // tq, Skv // tk)

    q_spec = pl.BlockSpec((1, tq, D), lambda b, qi, ki: (b, qi, 0))
    if fused_qkv:
        k_spec = pl.BlockSpec((1, tk, D), lambda b, qi, ki: (b, ki, 1))
        v_spec = pl.BlockSpec((1, tk, D), lambda b, qi, ki: (b, ki, 2))
    else:
        k_spec = pl.BlockSpec((1, tk, D), lambda b, qi, ki: (b, ki, 0))
        v_spec = pl.BlockSpec((1, tk, D), lambda b, qi, ki: (b, ki, 0))

    in_specs = [q_spec, k_spec, v_spec]
    inputs = [q_arr, k_arr, v_arr]
    if has_mask:
        if mask_i8.shape[0] == 1:
            in_specs.append(pl.BlockSpec((1, tq, tk), lambda b, qi, ki: (0, qi, ki)))
        else:
            in_specs.append(pl.BlockSpec((1, tq, tk), lambda b, qi, ki: (b, qi, ki)))
        inputs.append(mask_i8)

    kernel = functools.partial(
        _flash_mha_kernel, num_heads=num_heads, head_dim=Dh,
        compute_dtype=compute_dtype, has_mask=has_mask)

    return pl.pallas_call(
        kernel,
        out_shape=jax.ShapeDtypeStruct((B, Sq, D), out_dtype),
        grid_spec=pltpu.PrefetchScalarGridSpec(
            num_scalar_prefetch=0,
            grid=grid,
            in_specs=in_specs,
            out_specs=pl.BlockSpec((1, tq, D), lambda b, qi, ki: (b, qi, 0)),
            scratch_shapes=[
                pltpu.VMEM((num_heads, tq, 1), jnp.float32),    # running max m
                pltpu.VMEM((num_heads, tq, 1), jnp.float32),    # running sum l
                pltpu.VMEM((num_heads, tq, Dh), jnp.float32),   # output accumulator
            ],
        ),
        compiler_params=pltpu.CompilerParams(
            dimension_semantics=("parallel", "parallel", "arbitrary")),
    )(*inputs)


# ----------------------------------------------------------------------------
# MultiHeadAttention forward (thin JAX glue, hot paths in Pallas)
# ----------------------------------------------------------------------------
def multi_head_attention(params, query, key, value, num_heads, mask=None,
                         *, compute_dtype=jnp.bfloat16):
    """query/key/value: (B, S, d_model) f32; mask: (B, Sq, Skv) or (Sq, Skv),
    nonzero = keep.  params: w_q/b_q/w_k/b_k/w_v/b_v/w_o/b_o with w_* stored
    PyTorch-style as (out_features, in_features).  Dropout p=0.0 -> identity.
    Returns (B, Sq, d_model) float32."""
    B, Sq, D = query.shape
    Skv = key.shape[1]
    H = num_heads
    assert D % H == 0
    Dh = D // H
    q_scale = 1.0 / math.sqrt(Dh)

    # One-time wrapper work: transpose PyTorch (out, in) weights to (in, out) so the
    # tiled matmul needs no per-tile transpose, fold the softmax 1/sqrt(Dh) scale
    # into the Q projection, and cast weights to the MXU compute dtype.
    wq_t = (params["w_q"].T * q_scale).astype(compute_dtype)
    wk_t = params["w_k"].T.astype(compute_dtype)
    wv_t = params["w_v"].T.astype(compute_dtype)
    wo_t = params["w_o"].T.astype(compute_dtype)
    bq = params["b_q"] * q_scale

    fused = (query is key) and (query is value) and (D % 128 == 0)
    act_dtype = compute_dtype   # bf16 intermediates halve inter-kernel HBM traffic

    if fused:
        # One fused QKV matmul: read the activation once, wide-N MXU pass.
        w_qkv = jnp.concatenate([wq_t, wk_t, wv_t], axis=1)          # (D, 3D)
        b_qkv = jnp.concatenate([bq, params["b_k"], params["b_v"]])
        qkv = linear(query.reshape(B * Sq, D), w_qkv, b_qkv,
                     out_dtype=act_dtype, compute_dtype=compute_dtype
                     ).reshape(B, Sq, 3 * D)
        q_arr = k_arr = v_arr = qkv
    else:
        q_arr = linear(query.reshape(B * Sq, D), wq_t, bq,
                       out_dtype=act_dtype, compute_dtype=compute_dtype
                       ).reshape(B, Sq, D)
        k_arr = linear(key.reshape(B * Skv, D), wk_t, params["b_k"],
                       out_dtype=act_dtype, compute_dtype=compute_dtype
                       ).reshape(B, Skv, D)
        v_arr = linear(value.reshape(B * Skv, D), wv_t, params["b_v"],
                       out_dtype=act_dtype, compute_dtype=compute_dtype
                       ).reshape(B, Skv, D)

    if mask is None:
        mask_i8 = None                                   # no-mask kernel variant
    elif mask.ndim == 2:
        mask_i8 = (mask != 0).astype(jnp.int8)[None]     # (1, Sq, Skv), kept resident
    else:
        mask_i8 = (mask != 0).astype(jnp.int8)           # (B, Sq, Skv)

    attn = flash_mha(q_arr, k_arr, v_arr, mask_i8, num_heads=H, fused_qkv=fused,
                     out_dtype=act_dtype, compute_dtype=compute_dtype)   # (B, Sq, D)

    # TODO(synk): attn_weights (the full (B,H,S,S) softmax matrix the PyTorch module
    # caches on self) is intentionally never materialized by the flash kernel.
    out = linear(attn.reshape(B * Sq, D), wo_t, params["b_o"],
                 out_dtype=jnp.float32, compute_dtype=compute_dtype)
    return out.reshape(B, Sq, D)


# ----------------------------------------------------------------------------
# Pure-JAX reference (mirrors the PyTorch code exactly, highest matmul precision)
# ----------------------------------------------------------------------------
def reference_mha(params, query, key, value, num_heads, mask=None):
    B, Sq, D = query.shape
    Skv = key.shape[1]
    H = num_heads
    Dh = D // H

    def lin(x, w, b):
        return jnp.dot(x, w.T, precision="highest") + b

    def split(x, S):
        return x.reshape(B, S, H, Dh).transpose(0, 2, 1, 3)

    q = split(lin(query, params["w_q"], params["b_q"]), Sq)
    k = split(lin(key, params["w_k"], params["b_k"]), Skv)
    v = split(lin(value, params["w_v"], params["b_v"]), Skv)

    scores = jnp.einsum("bhqd,bhkd->bhqk", q, k, precision="highest") / math.sqrt(Dh)
    if mask is not None:
        m = mask if mask.ndim == 3 else mask[None]
        scores = jnp.where(m[:, None, :, :] == 0, -jnp.inf, scores)
    w_attn = jax.nn.softmax(scores, axis=-1)
    x = jnp.einsum("bhqk,bhkd->bhqd", w_attn, v, precision="highest")
    x = x.transpose(0, 2, 1, 3).reshape(B, Sq, D)
    return lin(x, params["w_o"], params["b_o"])


# ----------------------------------------------------------------------------
if __name__ == "__main__":
    B, S, D, H = 2, 8, 128, 4   # batch, seq, d_model (lane-aligned), num_heads

    root = jax.random.PRNGKey(0)
    keys = jax.random.split(root, 12)

    def init_w(k):
        return jax.random.normal(k, (D, D), dtype=jnp.float32) * 0.1

    def init_b(k):
        return jax.random.normal(k, (D,), dtype=jnp.float32) * 0.01

    params = {
        "w_q": init_w(keys[0]), "b_q": init_b(keys[1]),
        "w_k": init_w(keys[2]), "b_k": init_b(keys[3]),
        "w_v": init_w(keys[4]), "b_v": init_b(keys[5]),
        "w_o": init_w(keys[6]), "b_o": init_b(keys[7]),
    }

    query = jax.random.normal(keys[8], (B, S, D), dtype=jnp.float32)
    key_in = jax.random.normal(keys[9], (B, S, D), dtype=jnp.float32)
    value_in = jax.random.normal(keys[10], (B, S, D), dtype=jnp.float32)

    # Causal mask: 1 = keep, 0 = masked out.
    mask2d = jnp.tril(jnp.ones((S, S), dtype=jnp.float32))        # (S, S)
    mask3d = jnp.broadcast_to(mask2d[None], (B, S, S))            # (B, S, S)

    # 1) Default bf16 path: self-attention (fused QKV) with a 3D mask.
    out_bf16 = jax.block_until_ready(
        multi_head_attention(params, query, query, query, H, mask=mask3d))
    ref_self = reference_mha(params, query, query, query, H, mask=mask3d)
    assert out_bf16.shape == (B, S, D), out_bf16.shape
    err_bf16 = float(jnp.max(jnp.abs(out_bf16 - ref_self)))
    assert err_bf16 < 0.3, f"bf16 self-attention mismatch, max abs err = {err_bf16}"

    # 2) f32 operand path: self-attention (fused QKV), tight tolerance.
    out_f32 = jax.block_until_ready(
        multi_head_attention(params, query, query, query, H, mask=mask3d,
                             compute_dtype=jnp.float32))
    err_f32 = float(jnp.max(jnp.abs(out_f32 - ref_self)))
    assert err_f32 < 2e-3, f"f32 self-attention mismatch, max abs err = {err_f32}"

    # 3) f32 cross-attention (separate projections) with a shared 2D mask.
    out_cross = jax.block_until_ready(
        multi_head_attention(params, query, key_in, value_in, H, mask=mask2d,
                             compute_dtype=jnp.float32))
    ref_cross = reference_mha(params, query, key_in, value_in, H, mask=mask2d)
    err_cross = float(jnp.max(jnp.abs(out_cross - ref_cross)))
    assert err_cross < 2e-3, f"cross-attention mismatch, max abs err = {err_cross}"

    # 4) bf16 no-mask kernel variant (mask input dropped entirely).
    out_nomask = jax.block_until_ready(
        multi_head_attention(params, query, query, query, H, mask=None))
    ref_nomask = reference_mha(params, query, query, query, H, mask=None)
    err_nomask = float(jnp.max(jnp.abs(out_nomask - ref_nomask)))
    assert err_nomask < 0.3, f"no-mask path mismatch, max abs err = {err_nomask}"

    print("KERNEL_OK")
</pallas_src>

<mosaic_0001>
module attributes {stable_mosaic.version = 11 : i64} {
  func.func @_linear_kernel(%arg0: i32, %arg1: i32, %arg2: i32, %arg3: memref<16x128xf32, #tpu.memory_space<vmem>>, %arg4: memref<128x128xbf16, #tpu.memory_space<vmem>>, %arg5: memref<1x128xf32, #tpu.memory_space<vmem>>, %arg6: memref<16x128xbf16, #tpu.memory_space<vmem>>, %arg7: memref<16x128xf32, #tpu.memory_space<vmem>>) attributes {dimension_semantics = [#tpu.dimension_semantics<parallel>, #tpu.dimension_semantics<parallel>, #tpu.dimension_semantics<arbitrary>], iteration_bounds = array<i64: 1, 3, 1>, scalar_prefetch = 0 : i64, scratch_operands = 1 : i64, tpu.core_type = #tpu.core_type<tc>, window_params = [{transform_indices = @transform_0, window_bounds = array<i64: 16, 128>}, {transform_indices = @transform_1, window_bounds = array<i64: 128, 128>}, {transform_indices = @transform_2, window_bounds = array<i64: 1, 128>}, {transform_indices = @transform_3, window_bounds = array<i64: 16, 128>}]} {
    %c0_i32 = arith.constant 0 : i32
    %0 = arith.cmpi eq, %arg2, %c0_i32 : i32
    %1 = arith.extui %0 : i1 to i32
    %c0_i32_0 = arith.constant 0 : i32
    %2 = arith.cmpi ne, %1, %c0_i32_0 : i32
    scf.if %2 {
      %cst_10 = arith.constant 0.000000e+00 : f32
      %13 = vector.broadcast %cst_10 : f32 to vector<16x128xf32>
      %c0_11 = arith.constant 0 : index
      %c0_12 = arith.constant 0 : index
      %14 = vector.load %arg7[%c0_11, %c0_12] : memref<16x128xf32, #tpu.memory_space<vmem>>, vector<16x128xf32>
      tpu.vector_store %arg7[%c0_11, %c0_12], %13 {strides = array<i32>} : memref<16x128xf32, #tpu.memory_space<vmem>>, vector<16x128xf32>,
    } else {
    }
    %c0 = arith.constant 0 : index
    %c0_1 = arith.constant 0 : index
    %3 = vector.load %arg3[%c0, %c0_1] : memref<16x128xf32, #tpu.memory_space<vmem>>, vector<16x128xf32>
    %4 = arith.truncf %3 : vector<16x128xf32> to vector<16x128xbf16>
    %c0_2 = arith.constant 0 : index
    %c0_3 = arith.constant 0 : index
    %5 = vector.load %arg4[%c0_2, %c0_3] : memref<128x128xbf16, #tpu.memory_space<vmem>>, vector<128x128xbf16>
    %c0_4 = arith.constant 0 : index
    %c0_5 = arith.constant 0 : index
    %6 = vector.load %arg7[%c0_4, %c0_5] : memref<16x128xf32, #tpu.memory_space<vmem>>, vector<16x128xf32>
    %cst = arith.constant dense<0.000000e+00> : vector<16x128xf32>
    %7 = tpu.matmul %4, %5, %cst {dimension_numbers = #tpu.dot_dimension_numbers<[1], [0], [0], [1], [0, 0, 1, 1], [], []>} : vector<16x128xbf16>, vector<128x128xbf16>, vector<16x128xf32> -> vector<16x128xf32>
    %8 = arith.addf %6, %7 : vector<16x128xf32>
    %c0_6 = arith.constant 0 : index
    %c0_7 = arith.constant 0 : index
    %9 = vector.load %arg7[%c0_6, %c0_7] : memref<16x128xf32, #tpu.memory_space<vmem>>, vector<16x128xf32>
    tpu.vector_store %arg7[%c0_6, %c0_7], %8 {strides = array<i32>} : memref<16x128xf32, #tpu.memory_space<vmem>>, vector<16x128xf32>,
    %c0_i32_8 = arith.constant 0 : i32
    %10 = arith.cmpi eq, %arg2, %c0_i32_8 : i32
    %11 = arith.extui %10 : i1 to i32
    %c0_i32_9 = arith.constant 0 : i32
    %12 = arith.cmpi ne, %11, %c0_i32_9 : i32
    scf.if %12 {
      %c0_10 = arith.constant 0 : index
      %c0_11 = arith.constant 0 : index
      %13 = vector.load %arg7[%c0_10, %c0_11] : memref<16x128xf32, #tpu.memory_space<vmem>>, vector<16x128xf32>
      %c0_12 = arith.constant 0 : index
      %c0_13 = arith.constant 0 : index
      %14 = vector.load %arg5[%c0_12, %c0_13] : memref<1x128xf32, #tpu.memory_space<vmem>>, vector<1x128xf32>
      %15 = vector.broadcast %14 : vector<1x128xf32> to vector<16x128xf32>
      %16 = arith.addf %13, %15 : vector<16x128xf32>
      %17 = arith.truncf %16 : vector<16x128xf32> to vector<16x128xbf16>
      %c0_14 = arith.constant 0 : index
      %c0_15 = arith.constant 0 : index
      %18 = vector.load %arg6[%c0_14, %c0_15] : memref<16x128xbf16, #tpu.memory_space<vmem>>, vector<16x128xbf16>
      tpu.vector_store %arg6[%c0_14, %c0_15], %17 {strides = array<i32>} : memref<16x128xbf16, #tpu.memory_space<vmem>>, vector<16x128xbf16>,
    } else {
    }
    return
  }
  func.func @transform_0(%arg0: i32, %arg1: i32, %arg2: i32) -> (i32, i32) {
    %c0_i32 = arith.constant 0 : i32
    return %arg0, %arg2 : i32, i32
  }
  func.func @transform_1(%arg0: i32, %arg1: i32, %arg2: i32) -> (i32, i32) {
    %c0_i32 = arith.constant 0 : i32
    return %arg2, %arg1 : i32, i32
  }
  func.func @transform_2(%arg0: i32, %arg1: i32, %arg2: i32) -> (i32, i32) {
    %c0_i32 = arith.constant 0 : i32
    %c0_i32_0 = arith.constant 0 : i32
    return %c0_i32, %arg1 : i32, i32
  }
  func.func @transform_3(%arg0: i32, %arg1: i32, %arg2: i32) -> (i32, i32) {
    %c0_i32 = arith.constant 0 : i32
    return %arg0, %arg1 : i32, i32
  }
}

</mosaic_0001>

<llo_original>
// kernel: tpu_custom_call.1
$region0: #{tpu_custom_call.1}
  #allocation0 [shape = 'u32[]', space=smem, size = 0x4, offset = 0x4, fixed_abs, tag = 'smem constant byte address 0x4 - core index']
  #allocation1 [shape = 'u32[144,128]{1,0:T(1,128)}', space=vmem, size = 0x12000, scoped, tag = 'internal scratch']
  #allocation2 [shape = 'f32[16,128]{1,0:T(8,128)}', space=vmem, size = 0x2000, scoped, tag = 'scratch operand']
  %s0 = inlined_call_operand.hbm [shape: f32[16,128], index: 0, kind: input, shape index: {}]
  %s1 = inlined_call_operand.hbm [shape: bf16[128,384], index: 1, kind: input, shape index: {}]
  %s2 = inlined_call_operand.vmem [shape: f32[1,384], index: 2, kind: input, shape index: {}]
  %s3 = inlined_call_operand.hbm [shape: bf16[16,384], index: 3, kind: output, shape index: {}]
  %s4 = sld [smem:[#allocation0]]
  $region61: #{tpu_custom_call.1} parent=0
    _
  %s6 = ssub.s32 1, %s4
  %s7 = scalar_select 0, %s6, %s4
  $region1: #{tpu_custom_call.1} parent=0
    #allocation3 [shape = 'u8[8192]{0}', space=vmem, size = 0x2000, scoped, tag = 'input window, operand 0, single buffered']
    #allocation4 [shape = 's32[2]{0}', space=sflag, size = 0x8, scoped, tag = 'scoped memory for tpu_custom_call.1']
    #allocation5 [shape = 's32[2]{0}', space=sflag, size = 0x8, scoped, tag = 'scoped memory for tpu_custom_call.1']
    #allocation6 [shape = 'u8[65536]{0}', space=vmem, size = 0x10000, scoped, tag = 'input window, operand 1']
    #allocation7 [shape = 's32[2]{0}', space=sflag, size = 0x8, scoped, tag = 'scoped memory for tpu_custom_call.1']
    #allocation8 [shape = 'u8[8192]{0}', space=vmem, size = 0x2000, scoped, tag = 'output window, operand 0']
    %8 = vsyncpa [#allocation4], 0
    %9 = vsyncpa [#allocation7], 0
    %s10 = scalar_lea.sflag [#allocation7], 1
    %11 = vsyncpa %s10, 0
    %12 = vsyncpa [#allocation5], 0
    %s13 = scalar_lea.sflag [#allocation5], 1
    %14 = vsyncpa %s13, 0
    loop: start=0, step=1, limit=5
    $region2: #{tpu_custom_call.1} parent=1 // loop_pre_header
      _
    $region3: #{tpu_custom_call.1} parent=1 // loop_header
      %s16 = sphi 0, %s20
      %p17 = scmp.ge.s32.totalorder %s16, 5
      %s23 = sphi 0, %s42
      %s24 = sphi 0, %s38
      %s25 = sphi 0, %s34
      %s26 = sphi 0, %s23
      %s27 = sphi 0, %s24
      %s28 = sphi 0, %s25
      %s29 = sphi 0, %s26
      %s30 = sphi 0, %s27
      %s31 = sphi 0, %s28
      %s47 = sphi 0, %s49
      %s50 = sphi 0, %s47
      %s51 = sphi 0, %s50
      %s67 = sphi 0, %s51
      %s75 = sphi 0, %s77
      %s78 = sphi 0, %s75
      %s79 = sphi 0, %s78
      %s95 = sphi 0, %s79
      %s101 = sphi 0, %s103
      %s104 = sphi 0, %s101
      %s105 = sphi 0, %s104
      %s121 = sphi 0, %s105
      %s129 = sphi 0, %s131
      %s132 = sphi 0, %s129
      %s133 = sphi 0, %s132
      %s149 = sphi 0, %s133
    $region4: #{tpu_custom_call.1} parent=1 // loop_header_branch
      %19 = sbr.rel (%p17) target = $region8
    $region5: #{tpu_custom_call.1} parent=1 // loop_body
      %s21 = ssub.s32 %s16, 1
      %s22 = ssub.s32 %s16, 2
      %s32 = sadd.s32 1, %s25
      %p33 = scmp.ge.s32.totalorder %s32, 1
      %s34 = scalar_select %p33, 0, %s32
      %s35 = sadd.s32 1, %s24
      %s36 = scalar_select %p33, %s35, %s24
      %p37 = scmp.ge.s32.totalorder %s36, 3
      %s38 = scalar_select %p37, 0, %s36
      %s39 = sadd.s32 1, %s23
      %s40 = scalar_select %p37, %s39, %s23
      %p41 = scmp.ge.s32.totalorder %s40, 1
      %s42 = scalar_select %p41, 0, %s40
      %s43 = ssub.s32 %s23, %s42
      %s44 = ssub.s32 %s25, %s34
      %s45 = sor.u32 %s43, %s44
      %p46 = scmp.eq.s32.totalorder %s45, 0
      %s48 = sadd.s32 %s47, 1
      %s49 = scalar_select %p46, %s47, %s48
      %p52 = pneg %p46
      %p53 = scmp.eq.s32.totalorder %s16, 2
      %p54 = por %p52, %p53
      %p55 = scmp.ne.s32.totalorder %s47, %s50
      %p56 = scmp.eq.s32.totalorder %s16, 0
      %p57 = por %p55, %p56
      %p58 = scmp.ne.s32.totalorder %s47, %s50
      %p59 = scmp.eq.s32.totalorder %s21, 2
      %p60 = por %p58, %p59
      %p61 = scmp.ne.s32.totalorder %s50, %s51
      %p62 = scmp.eq.s32.totalorder %s21, 0
      %p63 = por %p61, %p62
      %p64 = scmp.ne.s32.totalorder %s50, %s51
      %p65 = scmp.eq.s32.totalorder %s22, 2
      %p66 = por %p64, %p65
      %p68 = scmp.ne.s32.totalorder %s51, %s67
      %p69 = scmp.eq.s32.totalorder %s22, 0
      %p70 = por %p68, %p69
      %s71 = ssub.s32 %s25, %s34
      %s72 = ssub.s32 %s24, %s38
      %s73 = sor.u32 %s71, %s72
      %p74 = scmp.eq.s32.totalorder %s73, 0
      %s76 = sadd.s32 %s75, 1
      %s77 = scalar_select %p74, %s75, %s76
      %p80 = pneg %p74
      %p81 = scmp.eq.s32.totalorder %s16, 2
      %p82 = por %p80, %p81
      %p83 = scmp.ne.s32.totalorder %s75, %s78
      %p84 = scmp.eq.s32.totalorder %s16, 0
      %p85 = por %p83, %p84
      %p86 = scmp.ne.s32.totalorder %s75, %s78
      %p87 = scmp.eq.s32.totalorder %s21, 2
      %p88 = por %p86, %p87
      %p89 = scmp.ne.s32.totalorder %s78, %s79
      %p90 = scmp.eq.s32.totalorder %s21, 0
      %p91 = por %p89, %p90
      %p92 = scmp.ne.s32.totalorder %s78, %s79
      %p93 = scmp.eq.s32.totalorder %s22, 2
      %p94 = por %p92, %p93
      %p96 = scmp.ne.s32.totalorder %s79, %s95
      %p97 = scmp.eq.s32.totalorder %s22, 0
      %p98 = por %p96, %p97
      %s99 = ssub.s32 %s24, %s38
      %p100 = scmp.eq.s32.totalorder %s99, 0
      %s102 = sadd.s32 %s101, 1
      %s103 = scalar_select %p100, %s101, %s102
      %p106 = pneg %p100
      %p107 = scmp.eq.s32.totalorder %s16, 2
      %p108 = por %p106, %p107
      %p109 = scmp.ne.s32.totalorder %s101, %s104
      %p110 = scmp.eq.s32.totalorder %s16, 0
      %p111 = por %p109, %p110
      %p112 = scmp.ne.s32.totalorder %s101, %s104
      %p113 = scmp.eq.s32.totalorder %s21, 2
      %p114 = por %p112, %p113
      %p115 = scmp.ne.s32.totalorder %s104, %s105
      %p116 = scmp.eq.s32.totalorder %s21, 0
      %p117 = por %p115, %p116
      %p118 = scmp.ne.s32.totalorder %s104, %s105
      %p119 = scmp.eq.s32.totalorder %s22, 2
      %p120 = por %p118, %p119
      %p122 = scmp.ne.s32.totalorder %s105, %s121
      %p123 = scmp.eq.s32.totalorder %s22, 0
      %p124 = por %p122, %p123
      %s125 = ssub.s32 %s23, %s42
      %s126 = ssub.s32 %s24, %s38
      %s127 = sor.u32 %s125, %s126
      %p128 = scmp.eq.s32.totalorder %s127, 0
      %s130 = sadd.s32 %s129, 1
      %s131 = scalar_select %p128, %s129, %s130
      %p134 = pneg %p128
      %p135 = scmp.eq.s32.totalorder %s16, 2
      %p136 = por %p134, %p135
      %p137 = scmp.ne.s32.totalorder %s129, %s132
      %p138 = scmp.eq.s32.totalorder %s16, 0
      %p139 = por %p137, %p138
      %p140 = scmp.ne.s32.totalorder %s129, %s132
      %p141 = scmp.eq.s32.totalorder %s21, 2
      %p142 = por %p140, %p141
      %p143 = scmp.ne.s32.totalorder %s132, %s133
      %p144 = scmp.eq.s32.totalorder %s21, 0
      %p145 = por %p143, %p144
      %p146 = scmp.ne.s32.totalorder %s132, %s133
      %p147 = scmp.eq.s32.totalorder %s22, 2
      %p148 = por %p146, %p147
      %p150 = scmp.ne.s32.totalorder %s133, %s149
      %p151 = scmp.eq.s32.totalorder %s22, 0
      %p152 = por %p150, %p151
      %p153 = scmp.le.s32.totalorder 1, %s16
      %p154 = scmp.lt.s32.totalorder %s16, 4
      %p155 = pnand %p153, %p154
      %p156 = pneg %p155
      // Predicated region
      $region9: #{tpu_custom_call.1} parent=5 // pred_check
        _
      $region10: #{tpu_custom_call.1} parent=5 // pred_check_branch
        %158 = sbr.rel (%p155) target = $region12
      $region11: #{tpu_custom_call.1} parent=5 // pred_region
        %s159 = ssub.s32 %s16, 1
        // Predicated region
        $region13: #{tpu_custom_call.1} parent=11 // pred_check
          %p160 = pneg %p63
        $region14: #{tpu_custom_call.1} parent=11 // pred_check_branch
          %162 = sbr.rel (%p160) target = $region16
        $region15: #{tpu_custom_call.1} parent=11 // pred_region
          %s163 = smul.u32 2, %s26
          %s165 = ssub.s32 256, 256
          %166 = vsyncadd [#allocation4], %s165
          %s167 = sadd.s32 %s28, %s163
          %s168 = smul.addr %s167, 128
          %s169 = scalar_lea.hbm %s0, %s168
          %s170 = sshll.u32 [#allocation3], 4
          %s171 = int_to_ptr.vmem [resolvable:$true] %s170
          %176 = dma.hbm_to_vmem [thread:$0]  %s169, 256, %s171, [#allocation4], 128, 128, 8
        $region16: #{tpu_custom_call.1} parent=11 // pred_fallthru
          _
      $region12: #{tpu_custom_call.1} parent=5 // pred_fallthru
        _
      %p177 = scmp.lt.s32.totalorder %s16, 3
      // Predicated region
      $region17: #{tpu_custom_call.1} parent=5 // pred_check
        %p178 = pneg %p177
      $region18: #{tpu_custom_call.1} parent=5 // pred_check_branch
        %180 = sbr.rel (%p178) target = $region20
      $region19: #{tpu_custom_call.1} parent=5 // pred_region
        // Predicated region
        $region21: #{tpu_custom_call.1} parent=19 // pred_check
          %p181 = pneg %p85
        $region22: #{tpu_custom_call.1} parent=19 // pred_check_branch
          %183 = sbr.rel (%p181) target = $region24
        $region23: #{tpu_custom_call.1} parent=19 // pred_region
          %s184 = sand.u32 %s75, 1
          %s185 = scalar_lea.sflag [#allocation7], %s184
          %s186 = sand.u32 %s75, 1
          %s187 = smul.addr %s186, 64
          %s188 = scalar_lea.vmem [#allocation6], %s187
          %s189 = smul.u32 16, %s25
          %s191 = ssub.s32 1024, 1024
          %192 = vsyncadd %s185, %s191
          %s193 = smul.addr %s189, 3
          %s194 = sadd.s32 %s24, %s193
          %s195 = smul.addr %s194, 64
          %s196 = scalar_lea.hbm %s1, %s195
          %s197 = sshll.u32 %s188, 4
          %s198 = int_to_ptr.vmem [resolvable:$true] %s197
          %203 = dma.hbm_to_vmem [thread:$0]  %s196, 1024, %s198, %s185, 192, 64, 4
        $region24: #{tpu_custom_call.1} parent=19 // pred_fallthru
          _
        // Predicated region
        $region25: #{tpu_custom_call.1} parent=19 // pred_check
          %p204 = pneg %p111
        $region26: #{tpu_custom_call.1} parent=19 // pred_check_branch
          %206 = sbr.rel (%p204) target = $region28
        $region27: #{tpu_custom_call.1} parent=19 // pred_region
          %p207 = scmp.lt.s32.totalorder %s24, 2
          %s208 = scalar_select %p207, %s24, 2
          %s209 = scalar_lea.vmem %s2, %s208
        $region28: #{tpu_custom_call.1} parent=19 // pred_fallthru
          _
      $region20: #{tpu_custom_call.1} parent=5 // pred_fallthru
        _
      %p210 = scmp.le.s32.totalorder 1, %s16
      %p211 = scmp.lt.s32.totalorder %s16, 4
      %p212 = pnand %p210, %p211
      %p213 = pneg %p212
      // Predicated region
      $region29: #{tpu_custom_call.1} parent=5 // pred_check
        _
      $region30: #{tpu_custom_call.1} parent=5 // pred_check_branch
        %215 = sbr.rel (%p212) target = $region32
      $region31: #{tpu_custom_call.1} parent=5 // pred_region
        %s216 = ssub.s32 %s16, 1
        // Predicated region
        $region33: #{tpu_custom_call.1} parent=31 // pred_check
          %p217 = pneg %p63
        $region34: #{tpu_custom_call.1} parent=31 // pred_check_branch
          %219 = sbr.rel (%p217) target = $region36
        $region35: #{tpu_custom_call.1} parent=31 // pred_region
          %220 = dma.done [#allocation4], 256
        $region36: #{tpu_custom_call.1} parent=31 // pred_fallthru
          _
        %s221 = sand.u32 %s78, 1
        %s222 = scalar_lea.sflag [#allocation7], %s221
        %s223 = sand.u32 %s78, 1
        %s224 = smul.addr %s223, 64
        %s225 = scalar_lea.vmem [#allocation6], %s224
        // Predicated region
        $region37: #{tpu_custom_call.1} parent=31 // pred_check
          %p226 = pneg %p91
        $region38: #{tpu_custom_call.1} parent=31 // pred_check_branch
          %228 = sbr.rel (%p226) target = $region40
        $region39: #{tpu_custom_call.1} parent=31 // pred_region
          %229 = dma.done %s222, 1024
        $region40: #{tpu_custom_call.1} parent=31 // pred_fallthru
          _
        %p230 = pneg %p63
        %p231 = pneg %p60
        %s232 = sand.u32 %s78, 1
        %s233 = scalar_lea.sflag [#allocation7], %s232
        %s234 = sand.u32 %s78, 1
        %s235 = smul.addr %s234, 64
        %s236 = scalar_lea.vmem [#allocation6], %s235
        %p237 = pneg %p91
        %p238 = pneg %p88
        %p239 = scmp.lt.s32.totalorder %s27, 2
        %s240 = scalar_select %p239, %s27, 2
        %s241 = scalar_lea.vmem %s2, %s240
        %p242 = pneg %p117
        %p243 = pneg %p114
        %p244 = pneg %p145
        %p245 = pneg %p142
        %s246 = sand.u32 %s132, 1
        %s247 = scalar_lea.sflag [#allocation5], %s246
        %s248 = sand.u32 %s132, 1
        %s249 = smul.addr %s248, 8
        %s250 = scalar_lea.vmem [#allocation8], %s249
        %s251 = smul.u32 2, %s26
        %s252 = smul.u32 16, %s28
        %p253 = scmp.lt.s32.totalorder %s27, 2
        %s254 = scalar_select %p253, %s27, 2
        %s255 = scalar_lea.vmem %s2, %s254
        %s256 = smul.u32 2, %s26
        %p258 = scmp.eq.s32.totalorder %s28, 0
        // Predicated region
        $region41: #{tpu_custom_call.1} parent=31 // pred_check
          %p259 = pneg %p258
        $region42: #{tpu_custom_call.1} parent=31 // pred_check_branch
          %261 = sbr.rel (%p259) target = $region44
        $region43: #{tpu_custom_call.1} parent=31 // pred_region
          %262 = vst [vmem:[#allocation2] sm:$0xff] 0.0
          %263 = vst [vmem:[#allocation2 + $0x8] sm:$0xff] 0.0
        $region44: #{tpu_custom_call.1} parent=31 // pred_fallthru
          _
        %v264 = vld [vmem:[#allocation3] sm:$0xff]
        %v265 = vld [vmem:[#allocation3 + $0x8] sm:$0xff]
        %v266 = vpack.c.bf16 %v265, %v264
        %v267 = vld [vmem:[%s225] sm:$0xf]
        %v268 = vld [vmem:[%s225 + $0x4] sm:$0xf]
        %v269 = vld [vmem:[%s225 + $0x8] sm:$0xf]
        %v270 = vld [vmem:[%s225 + $0xc] sm:$0xf]
        %v271 = vld [vmem:[%s225 + $0x10] sm:$0xf]
        %v272 = vld [vmem:[%s225 + $0x14] sm:$0xf]
        %v273 = vld [vmem:[%s225 + $0x18] sm:$0xf]
        %v274 = vld [vmem:[%s225 + $0x1c] sm:$0xf]
        %v275 = vld [vmem:[%s225 + $0x20] sm:$0xf]
        %v276 = vld [vmem:[%s225 + $0x24] sm:$0xf]
        %v277 = vld [vmem:[%s225 + $0x28] sm:$0xf]
        %v278 = vld [vmem:[%s225 + $0x2c] sm:$0xf]
        %v279 = vld [vmem:[%s225 + $0x30] sm:$0xf]
        %v280 = vld [vmem:[%s225 + $0x34] sm:$0xf]
        %v281 = vld [vmem:[%s225 + $0x38] sm:$0xf]
        %v282 = vld [vmem:[%s225 + $0x3c] sm:$0xf]
        %v283 = vld [vmem:[#allocation2] sm:$0xff]
        %v284 = vld [vmem:[#allocation2 + $0x8] sm:$0xff]
        %v301 = vunpack.c.l.b16 %v267
        %v302 = vunpack.c.l.b16 %v268
        %v303 = vunpack.c.l.b16 %v269
        %v304 = vunpack.c.l.b16 %v270
        %v305 = vunpack.c.l.b16 %v271
        %v306 = vunpack.c.l.b16 %v272
        %v307 = vunpack.c.l.b16 %v273
        %v308 = vunpack.c.l.b16 %v274
        %v309 = vunpack.c.l.b16 %v275
        %v310 = vunpack.c.l.b16 %v276
        %v311 = vunpack.c.l.b16 %v277
        %v312 = vunpack.c.l.b16 %v278
        %v313 = vunpack.c.l.b16 %v279
        %v314 = vunpack.c.l.b16 %v280
        %v315 = vunpack.c.l.b16 %v281
        %v316 = vunpack.c.l.b16 %v282
        %v317 = vpack.c.b16 %v302, %v301
        %v318 = vpack.c.b16 %v304, %v303
        %v319 = vpack.c.b16 %v306, %v305
        %v320 = vpack.c.b16 %v308, %v307
        %v321 = vpack.c.b16 %v310, %v309
        %v322 = vpack.c.b16 %v312, %v311
        %v323 = vpack.c.b16 %v314, %v313
        %v324 = vpack.c.b16 %v316, %v315
        %333 = vmatprep.subr.bf16.mxu0 0
        %334 = vmatpush1.bf16.msra.mxu0 %v324
        %335 = vmatprep.subr.bf16.mxu0 0
        %336 = vmatpush1.bf16.msra.mxu0 %v323
        %337 = vmatprep.subr.bf16.mxu0 0
        %338 = vmatpush1.bf16.msra.mxu0 %v322
        %339 = vmatprep.subr.bf16.mxu0 0
        %340 = vmatpush1.bf16.msra.mxu0 %v321
        %341 = vmatprep.subr.bf16.mxu0 0
        %342 = vmatpush1.bf16.msra.mxu0 %v320
        %343 = vmatprep.subr.bf16.mxu0 0
        %344 = vmatpush1.bf16.msra.mxu0 %v319
        %345 = vmatprep.subr.bf16.mxu0 0
        %346 = vmatpush1.bf16.msra.mxu0 %v318
        %347 = vmatprep.subr.bf16.mxu0 0
        %348 = vmatpush1.bf16.msra.mxu0 %v317
        %349 = vmatprep.subr.bf16.mxu0 0
        %350 = vmatpush2.bf16.msra.mxu0 0
        %351 = vmatprep.subr.bf16.mxu0 0
        %352 = vmatpush2.bf16.msra.mxu0 0
        %353 = vmatprep.subr.bf16.mxu0 0
        %354 = vmatpush2.bf16.msra.mxu0 0
        %355 = vmatprep.subr.bf16.mxu0 0
        %356 = vmatpush2.bf16.msra.mxu0 0
        %357 = vmatprep.subr.bf16.mxu0 0
        %358 = vmatpush2.bf16.msra.mxu0 0
        %359 = vmatprep.subr.bf16.mxu0 0
        %360 = vmatpush2.bf16.msra.mxu0 0
        %361 = vmatprep.subr.bf16.mxu0 0
        %362 = vmatpush2.bf16.msra.mxu0 0
        %363 = vmatprep.subr.bf16.mxu0 0
        %364 = vmatpush2.bf16.msra.mxu0 0
        %365 = vmatprep.mubr.bf16.mxu0 0
        %366 = vmatmul.mubr.bf16.gmra.mxu0 %v266
        %v367 = vpop.f32.mrf.mxu0
        %v368 = vadd.f32 0.0, %v367
        %v369 = vpop.f32.mrf.mxu0
        %v370 = vpop.f32.mrf.mxu0
        %v371 = vadd.f32 0.0, %v370
        %v372 = vpop.f32.mrf.mxu0
        %373 = vdwg.mxu0
        %v374 = vadd.f32 %v283, %v368
        %v375 = vadd.f32 %v284, %v371
        %376 = vst [vmem:[#allocation2] sm:$0xff] %v374
        %377 = vst [vmem:[#allocation2 + $0x8] sm:$0xff] %v375
        // Predicated region
        $region45: #{tpu_custom_call.1} parent=31 // pred_check
          %p378 = pneg %p258
        $region46: #{tpu_custom_call.1} parent=31 // pred_check_branch
          %380 = sbr.rel (%p378) target = $region48
        $region47: #{tpu_custom_call.1} parent=31 // pred_region
          %v381 = vld [vmem:[#allocation2] sm:$0xff]
          %v382 = vld [vmem:[#allocation2 + $0x8] sm:$0xff]
          %v383 = vld [vmem:[%s255] sm:$0x1]
          %v385 = vlaneseq
          %v386 = vshrl.u32 %v385, 7
          %v387 = vsub.s32 0, %v386
          %v388 = vrot.slane %v383, %v387
          %v390 = vadd.f32 %v381, %v388
          %v391 = vadd.f32 %v382, %v388
          %v392 = vpack.c.bf16 %v391, %v390
          %v394 = vunpack.c.l.b16 %v392
          %v395 = vunpack.c.h.b16 %v392
          %v396 = vpack.c.b16 %v394, %v394
          %v397 = vpack.c.b16 %v395, %v395
          %400 = vst [vmem:[%s250] sm:$0xf] %v396
          %401 = vst [vmem:[%s250 + $0x4] sm:$0xf] %v397
        $region48: #{tpu_custom_call.1} parent=31 // pred_fallthru
          _
        %s402 = sand.u32 %s132, 1
        %s403 = scalar_lea.sflag [#allocation5], %s402
        %s404 = sand.u32 %s132, 1
        %s405 = smul.addr %s404, 8
        %s406 = scalar_lea.vmem [#allocation8], %s405
        // Predicated region
        $region49: #{tpu_custom_call.1} parent=31 // pred_check
          %p407 = pneg %p142
        $region50: #{tpu_custom_call.1} parent=31 // pred_check_branch
          %409 = sbr.rel (%p407) target = $region52
        $region51: #{tpu_custom_call.1} parent=31 // pred_region
          %s410 = smul.u32 2, %s26
          %s412 = ssub.s32 128, 128
          %413 = vsyncadd %s403, %s412
          %s414 = smul.addr %s410, 3
          %s415 = sadd.s32 %s27, %s414
          %s416 = smul.addr %s415, 64
          %s417 = scalar_lea.hbm %s3, %s416
          %s418 = sshll.u32 %s406, 4
          %s419 = int_to_ptr.vmem [resolvable:$true] %s418
          %424 = dma.vmem_to_hbm [thread:$0]  %s419, 128, %s417, %s403, 64, 192, 4
        $region52: #{tpu_custom_call.1} parent=31 // pred_fallthru
          _
      $region32: #{tpu_custom_call.1} parent=5 // pred_fallthru
        _
      %p425 = scmp.le.s32.totalorder 2, %s16
      // Predicated region
      $region53: #{tpu_custom_call.1} parent=5 // pred_check
        %p426 = pneg %p425
      $region54: #{tpu_custom_call.1} parent=5 // pred_check_branch
        %428 = sbr.rel (%p426) target = $region56
      $region55: #{tpu_custom_call.1} parent=5 // pred_region
        %s429 = ssub.s32 %s16, 2
        // Predicated region
        $region57: #{tpu_custom_call.1} parent=55 // pred_check
          %p430 = pneg %p148
        $region58: #{tpu_custom_call.1} parent=55 // pred_check_branch
          %432 = sbr.rel (%p430) target = $region60
        $region59: #{tpu_custom_call.1} parent=55 // pred_region
          %s433 = sand.u32 %s133, 1
          %s434 = scalar_lea.sflag [#allocation5], %s433
          %s435 = sand.u32 %s133, 1
          %s436 = smul.addr %s435, 8
          %s437 = scalar_lea.vmem [#allocation8], %s436
          %438 = dma.done %s434, 128
        $region60: #{tpu_custom_call.1} parent=55 // pred_fallthru
          _
      $region56: #{tpu_custom_call.1} parent=5 // pred_fallthru
        _
    $region6: #{tpu_custom_call.1} parent=1 // loop_footer
      %s20 = sadd.s32 1, %s16
    $region7: #{tpu_custom_call.1} parent=1 // loop_footer_branch
      %15 = sbr.rel target = $region3
    $region8: #{tpu_custom_call.1} parent=1 // loop_exit
      _
    %439 = vsyncpa [#allocation4], 1
    %s440 = scalar_lea.sflag [#allocation4], 1
    %441 = vsyncpa %s440, 1
    %442 = vsyncpa [#allocation7], 1
    %s443 = scalar_lea.sflag [#allocation7], 1
    %444 = vsyncpa %s443, 1
    %445 = vsyncpa [#allocation5], 1
    %s446 = scalar_lea.sflag [#allocation5], 1
    %447 = vsyncpa %s446, 1

</llo_original>
